<compile_context>
chip_gen: v7x
topology: tpu7x:2x2x1
jax: 0.10.0
libtpu: 0.0.40
codegen_flags: <defaults>
</compile_context>

<pallas_src>
import functools

import jax
import jax.numpy as jnp
from jax import lax
from jax.experimental import pallas as pl
from jax.experimental.pallas import tpu as pltpu


def _round8(n):
    return (n + 7) // 8 * 8


def _layernorm(x, w, b, eps=1e-5):
    mu = jnp.mean(x, axis=-1, keepdims=True)
    var = jnp.mean((x - mu) ** 2, axis=-1, keepdims=True)
    return (x - mu) * lax.rsqrt(var + eps) * w + b


def small_model_kernel(ids_ref, slab_ref, out_ref, *, H, FF, V,
                       r_fc1w, r_fc1b, r_fc2w, r_small, r_embed):
    N = ids_ref.shape[0]

    # --- embedding lookup as one-hot (N, V) @ (V, H) MXU matmul (no serialized gather) ---
    ids = ids_ref[...]                                                      # (N, 1) int32
    onehot = (lax.broadcasted_iota(jnp.int32, (N, V), 1) == ids).astype(jnp.float32)
    embed = slab_ref[r_embed:r_embed + V, 0:H]                              # (V, H)
    x = jnp.dot(onehot, embed, preferred_element_type=jnp.float32)          # (N, H)

    # --- static ref views into the pre-packed parameter slab (single VMEM input) ---
    fc1_w = slab_ref[r_fc1w:r_fc1w + H, 0:FF]           # (H, 4H)
    fc1_b = slab_ref[r_fc1b:r_fc1b + 1, 0:FF]           # (1, 4H)
    fc2_w = slab_ref[r_fc2w:r_fc2w + FF, 0:H]            # (4H, H)
    fc2_b = slab_ref[r_small + 0:r_small + 1, 0:H]
    ln1_w = slab_ref[r_small + 1:r_small + 2, 0:H]
    ln1_b = slab_ref[r_small + 2:r_small + 3, 0:H]
    ln2_w = slab_ref[r_small + 3:r_small + 4, 0:H]
    ln2_b = slab_ref[r_small + 4:r_small + 5, 0:H]
    ecol = slab_ref[r_small + 5:r_small + 6, 0:H]        # colsum(embed)/S, precomputed at init

    # --- MLP: Linear(H,4H) -> GELU(tanh) -> Linear(4H,H), all f32 ---
    h = jnp.dot(x, fc1_w, preferred_element_type=jnp.float32) + fc1_b
    h = jax.nn.gelu(h, approximate=True)
    m = jnp.dot(h, fc2_w, preferred_element_type=jnp.float32) + fc2_b

    # --- residual with LayerNorm(mlp_out), then second LayerNorm ---
    x = x + _layernorm(m, ln1_w, ln1_b)
    n2 = _layernorm(x, ln2_w, ln2_b)

    # --- tied projection (bias=False) + mean over seq + global sum, folded to one reduce ---
    out_ref[0, 0] = jnp.sum(n2 * ecol)


def pack_params(params, seq_len):
    """Build the single parameter slab ONCE (out of the hot path)."""
    (embed_w, ln1_w, ln1_b, fc1_w, fc1_b, fc2_w, fc2_b, ln2_w, ln2_b) = params
    V, H = embed_w.shape
    FF = fc1_w.shape[1]

    r_fc1w = 0
    r_fc1b = _round8(r_fc1w + H)
    r_fc2w = _round8(r_fc1b + 1)
    r_small = _round8(r_fc2w + FF)
    r_embed = _round8(r_small + 6)
    r_total = _round8(r_embed + V)

    slab = jnp.zeros((r_total, FF), jnp.float32)
    slab = slab.at[r_fc1w:r_fc1w + H, :FF].set(fc1_w)
    slab = slab.at[r_fc1b:r_fc1b + 1, :FF].set(fc1_b)
    slab = slab.at[r_fc2w:r_fc2w + FF, :H].set(fc2_w)
    ecol = jnp.sum(embed_w, axis=0, keepdims=True) / float(seq_len)
    small = jnp.concatenate([fc2_b, ln1_w, ln1_b, ln2_w, ln2_b, ecol], axis=0)
    slab = slab.at[r_small:r_small + 6, :H].set(small)
    slab = slab.at[r_embed:r_embed + V, :H].set(embed_w)

    layout = dict(H=H, FF=FF, V=V, r_fc1w=r_fc1w, r_fc1b=r_fc1b,
                  r_fc2w=r_fc2w, r_small=r_small, r_embed=r_embed)
    return slab, layout


def make_forward(layout):
    H, FF, V = layout["H"], layout["FF"], layout["V"]
    kernel = functools.partial(small_model_kernel, **layout)

    @jax.jit
    def forward(ids, slab):
        B, S = ids.shape
        N = B * S
        ids_col = ids.reshape(N, 1).astype(jnp.int32)
        cost = pl.CostEstimate(
            flops=2 * N * (V * H + H * FF + FF * H),
            transcendentals=N * FF + 2 * N,
            bytes_accessed=N * 4 + slab.size * 4 + 4,
        )
        out = pl.pallas_call(
            kernel,
            out_shape=jax.ShapeDtypeStruct((1, 1), jnp.float32),
            in_specs=[pl.BlockSpec(memory_space=pltpu.MemorySpace.VMEM),
                      pl.BlockSpec(memory_space=pltpu.MemorySpace.VMEM)],
            out_specs=pl.BlockSpec(memory_space=pltpu.MemorySpace.SMEM),
            cost_estimate=cost,
        )(ids_col, slab)
        return out[0, 0]

    return forward


def init_params(key, num_embeddings=20, hidden_dim=16):
    H, V = hidden_dim, num_embeddings
    ks = jax.random.split(key, 6)
    embed_w = jax.random.normal(ks[0], (V, H), jnp.float32)   # Embedding (and tied proj) weight
    ln1_w = jnp.ones((1, H), jnp.float32)
    ln1_b = jnp.zeros((1, H), jnp.float32)
    ln2_w = jnp.ones((1, H), jnp.float32)
    ln2_b = jnp.zeros((1, H), jnp.float32)
    # Linear weights stored as (in, out) for direct x @ W in the kernel.
    fc1_w = jax.random.normal(ks[1], (H, 4 * H), jnp.float32) * (1.0 / jnp.sqrt(H))
    fc1_b = jax.random.normal(ks[2], (1, 4 * H), jnp.float32) * 0.01
    fc2_w = jax.random.normal(ks[3], (4 * H, H), jnp.float32) * (1.0 / jnp.sqrt(4 * H))
    fc2_b = jax.random.normal(ks[4], (1, H), jnp.float32) * 0.01
    return (embed_w, ln1_w, ln1_b, fc1_w, fc1_b, fc2_w, fc2_b, ln2_w, ln2_b)


if __name__ == "__main__":
    key = jax.random.PRNGKey(0)
    k_param, k_ids = jax.random.split(key)

    num_embeddings, hidden_dim = 20, 16
    B, S = 2, 8
    params = init_params(k_param, num_embeddings, hidden_dim)
    ids = jax.random.randint(k_ids, (B, S), 0, num_embeddings, dtype=jnp.int32)

    # one-time packing (out of the hot path)
    slab, layout = pack_params(params, seq_len=S)
    forward = make_forward(layout)

    out = forward(ids, slab)
    jax.block_until_ready(out)

    # pure-JAX reference (unfused, materializes logits) for a correctness check
    def ref(ids, params):
        (embed_w, ln1_w, ln1_b, fc1_w, fc1_b, fc2_w, fc2_b, ln2_w, ln2_b) = params

        def ln(x, w, b):
            mu = x.mean(-1, keepdims=True)
            var = ((x - mu) ** 2).mean(-1, keepdims=True)
            return (x - mu) / jnp.sqrt(var + 1e-5) * w + b

        x = embed_w[ids]                                           # (B, S, H)
        h = jax.nn.gelu(x @ fc1_w + fc1_b, approximate=True) @ fc2_w + fc2_b
        x = x + ln(h, ln1_w, ln1_b)
        logits = ln(x, ln2_w, ln2_b) @ embed_w.T                   # (B, S, V)
        return logits.mean(axis=-2).sum()

    expected = ref(ids, params)
    assert jnp.allclose(out, expected, rtol=1e-4, atol=1e-3), (out, expected)
    print("KERNEL_OK")
</pallas_src>

<mosaic_0001>
module attributes {stable_mosaic.version = 11 : i64} {
  func.func @small_model_kernel(%arg0: memref<16x1xi32, #tpu.memory_space<vmem>>, %arg1: memref<120x64xf32, #tpu.memory_space<vmem>>, %arg2: memref<1x1xf32, #tpu.memory_space<smem>>) attributes {dimension_semantics = [], scalar_prefetch = 0 : i64, scratch_operands = 0 : i64, tpu.core_type = #tpu.core_type<tc>} {
    %c0 = arith.constant 0 : index
    %c0_0 = arith.constant 0 : index
    %0 = vector.load %arg0[%c0, %c0_0] : memref<16x1xi32, #tpu.memory_space<vmem>>, vector<16x1xi32>
    %1 = tpu.iota {dimensions = array<i32: 1>} : vector<16x20xi32>
    %2 = vector.broadcast %0 : vector<16x1xi32> to vector<16x20xi32>
    %3 = arith.cmpi eq, %1, %2 : vector<16x20xi32>
    %4 = arith.extui %3 : vector<16x20xi1> to vector<16x20xi32>
    %5 = arith.sitofp %4 : vector<16x20xi32> to vector<16x20xf32>
    %c96 = arith.constant 96 : index
    %c0_1 = arith.constant 0 : index
    %6 = vector.load %arg1[%c96, %c0_1] : memref<120x64xf32, #tpu.memory_space<vmem>>, vector<20x16xf32>
    %cst = arith.constant dense<0.000000e+00> : vector<16x16xf32>
    %7 = tpu.matmul %5, %6, %cst {dimension_numbers = #tpu.dot_dimension_numbers<[1], [0], [0], [1], [0, 0, 1, 1], [], []>} : vector<16x20xf32>, vector<20x16xf32>, vector<16x16xf32> -> vector<16x16xf32>
    %c0_2 = arith.constant 0 : index
    %c0_3 = arith.constant 0 : index
    %8 = vector.load %arg1[%c0_2, %c0_3] : memref<120x64xf32, #tpu.memory_space<vmem>>, vector<16x64xf32>
    %c16 = arith.constant 16 : index
    %c0_4 = arith.constant 0 : index
    %9 = vector.load %arg1[%c16, %c0_4] : memref<120x64xf32, #tpu.memory_space<vmem>>, vector<1x64xf32>
    %c24 = arith.constant 24 : index
    %c0_5 = arith.constant 0 : index
    %10 = vector.load %arg1[%c24, %c0_5] : memref<120x64xf32, #tpu.memory_space<vmem>>, vector<64x16xf32>
    %c88 = arith.constant 88 : index
    %c0_6 = arith.constant 0 : index
    %11 = vector.load %arg1[%c88, %c0_6] : memref<120x64xf32, #tpu.memory_space<vmem>>, vector<1x16xf32>
    %c89 = arith.constant 89 : index
    %c0_7 = arith.constant 0 : index
    %12 = vector.load %arg1[%c89, %c0_7] : memref<120x64xf32, #tpu.memory_space<vmem>>, vector<1x16xf32>
    %c90 = arith.constant 90 : index
    %c0_8 = arith.constant 0 : index
    %13 = vector.load %arg1[%c90, %c0_8] : memref<120x64xf32, #tpu.memory_space<vmem>>, vector<1x16xf32>
    %c91 = arith.constant 91 : index
    %c0_9 = arith.constant 0 : index
    %14 = vector.load %arg1[%c91, %c0_9] : memref<120x64xf32, #tpu.memory_space<vmem>>, vector<1x16xf32>
    %c92 = arith.constant 92 : index
    %c0_10 = arith.constant 0 : index
    %15 = vector.load %arg1[%c92, %c0_10] : memref<120x64xf32, #tpu.memory_space<vmem>>, vector<1x16xf32>
    %c93 = arith.constant 93 : index
    %c0_11 = arith.constant 0 : index
    %16 = vector.load %arg1[%c93, %c0_11] : memref<120x64xf32, #tpu.memory_space<vmem>>, vector<1x16xf32>
    %cst_12 = arith.constant dense<0.000000e+00> : vector<16x64xf32>
    %17 = tpu.matmul %7, %8, %cst_12 {dimension_numbers = #tpu.dot_dimension_numbers<[1], [0], [0], [1], [0, 0, 1, 1], [], []>} : vector<16x16xf32>, vector<16x64xf32>, vector<16x64xf32> -> vector<16x64xf32>
    %18 = vector.broadcast %9 : vector<1x64xf32> to vector<16x64xf32>
    %19 = arith.addf %17, %18 : vector<16x64xf32>
    %20 = arith.mulf %19, %19 : vector<16x64xf32>
    %21 = arith.mulf %19, %20 : vector<16x64xf32>
    %cst_13 = arith.constant 4.471500e-02 : f32
    %22 = vector.broadcast %cst_13 : f32 to vector<16x64xf32>
    %23 = arith.mulf %22, %21 : vector<16x64xf32>
    %24 = arith.addf %19, %23 : vector<16x64xf32>
    %cst_14 = arith.constant 0.797884583 : f32
    %25 = vector.broadcast %cst_14 : f32 to vector<16x64xf32>
    %26 = arith.mulf %25, %24 : vector<16x64xf32>
    %27 = math.tanh %26 : vector<16x64xf32>
    %cst_15 = arith.constant 1.000000e+00 : f32
    %28 = vector.broadcast %cst_15 : f32 to vector<16x64xf32>
    %29 = arith.addf %28, %27 : vector<16x64xf32>
    %cst_16 = arith.constant 5.000000e-01 : f32
    %30 = vector.broadcast %cst_16 : f32 to vector<16x64xf32>
    %31 = arith.mulf %30, %29 : vector<16x64xf32>
    %32 = arith.mulf %19, %31 : vector<16x64xf32>
    %cst_17 = arith.constant dense<0.000000e+00> : vector<16x16xf32>
    %33 = tpu.matmul %32, %10, %cst_17 {dimension_numbers = #tpu.dot_dimension_numbers<[1], [0], [0], [1], [0, 0, 1, 1], [], []>} : vector<16x64xf32>, vector<64x16xf32>, vector<16x16xf32> -> vector<16x16xf32>
    %34 = vector.broadcast %11 : vector<1x16xf32> to vector<16x16xf32>
    %35 = arith.addf %33, %34 : vector<16x16xf32>
    %cst_18 = arith.constant dense<0.000000e+00> : vector<16xf32>
    %36 = vector.multi_reduction <add>, %35, %cst_18 [1] : vector<16x16xf32> to vector<16xf32>
    %37 = vector.shape_cast %36 : vector<16xf32> to vector<16x1xf32>
    %cst_19 = arith.constant 1.600000e+01 : f32
    %38 = vector.broadcast %cst_19 : f32 to vector<16x1xf32>
    %39 = arith.divf %37, %38 : vector<16x1xf32>
    %40 = vector.broadcast %39 : vector<16x1xf32> to vector<16x16xf32>
    %41 = arith.subf %35, %40 : vector<16x16xf32>
    %42 = arith.mulf %41, %41 : vector<16x16xf32>
    %cst_20 = arith.constant dense<0.000000e+00> : vector<16xf32>
    %43 = vector.multi_reduction <add>, %42, %cst_20 [1] : vector<16x16xf32> to vector<16xf32>
    %44 = vector.shape_cast %43 : vector<16xf32> to vector<16x1xf32>
    %cst_21 = arith.constant 1.600000e+01 : f32
    %45 = vector.broadcast %cst_21 : f32 to vector<16x1xf32>
    %46 = arith.divf %44, %45 : vector<16x1xf32>
    %47 = vector.broadcast %39 : vector<16x1xf32> to vector<16x16xf32>
    %48 = arith.subf %35, %47 : vector<16x16xf32>
    %cst_22 = arith.constant 9.99999974E-6 : f32
    %49 = vector.broadcast %cst_22 : f32 to vector<16x1xf32>
    %50 = arith.addf %46, %49 : vector<16x1xf32>
    %51 = math.rsqrt %50 : vector<16x1xf32>
    %52 = vector.broadcast %51 : vector<16x1xf32> to vector<16x16xf32>
    %53 = arith.mulf %48, %52 : vector<16x16xf32>
    %54 = vector.broadcast %12 : vector<1x16xf32> to vector<16x16xf32>
    %55 = arith.mulf %53, %54 : vector<16x16xf32>
    %56 = vector.broadcast %13 : vector<1x16xf32> to vector<16x16xf32>
    %57 = arith.addf %55, %56 : vector<16x16xf32>
    %58 = arith.addf %7, %57 : vector<16x16xf32>
    %cst_23 = arith.constant dense<0.000000e+00> : vector<16xf32>
    %59 = vector.multi_reduction <add>, %58, %cst_23 [1] : vector<16x16xf32> to vector<16xf32>
    %60 = vector.shape_cast %59 : vector<16xf32> to vector<16x1xf32>
    %cst_24 = arith.constant 1.600000e+01 : f32
    %61 = vector.broadcast %cst_24 : f32 to vector<16x1xf32>
    %62 = arith.divf %60, %61 : vector<16x1xf32>
    %63 = vector.broadcast %62 : vector<16x1xf32> to vector<16x16xf32>
    %64 = arith.subf %58, %63 : vector<16x16xf32>
    %65 = arith.mulf %64, %64 : vector<16x16xf32>
    %cst_25 = arith.constant dense<0.000000e+00> : vector<16xf32>
    %66 = vector.multi_reduction <add>, %65, %cst_25 [1] : vector<16x16xf32> to vector<16xf32>
    %67 = vector.shape_cast %66 : vector<16xf32> to vector<16x1xf32>
    %cst_26 = arith.constant 1.600000e+01 : f32
    %68 = vector.broadcast %cst_26 : f32 to vector<16x1xf32>
    %69 = arith.divf %67, %68 : vector<16x1xf32>
    %70 = vector.broadcast %62 : vector<16x1xf32> to vector<16x16xf32>
    %71 = arith.subf %58, %70 : vector<16x16xf32>
    %cst_27 = arith.constant 9.99999974E-6 : f32
    %72 = vector.broadcast %cst_27 : f32 to vector<16x1xf32>
    %73 = arith.addf %69, %72 : vector<16x1xf32>
    %74 = math.rsqrt %73 : vector<16x1xf32>
    %75 = vector.broadcast %74 : vector<16x1xf32> to vector<16x16xf32>
    %76 = arith.mulf %71, %75 : vector<16x16xf32>
    %77 = vector.broadcast %14 : vector<1x16xf32> to vector<16x16xf32>
    %78 = arith.mulf %76, %77 : vector<16x16xf32>
    %79 = vector.broadcast %15 : vector<1x16xf32> to vector<16x16xf32>
    %80 = arith.addf %78, %79 : vector<16x16xf32>
    %81 = vector.broadcast %16 : vector<1x16xf32> to vector<16x16xf32>
    %82 = arith.mulf %80, %81 : vector<16x16xf32>
    %83 = vector.shape_cast %82 : vector<16x16xf32> to vector<1x16x16xf32>
    %cst_28 = arith.constant dense<0.000000e+00> : vector<1xf32>
    %84 = vector.multi_reduction <add>, %83, %cst_28 [1, 2] : vector<1x16x16xf32> to vector<1xf32>
    %85 = vector.shape_cast %84 : vector<1xf32> to vector<1x1x1xf32>
    %86 = vector.extract %85[0, 0, 0] : f32 from vector<1x1x1xf32>
    %c0_29 = arith.constant 0 : index
    %c0_30 = arith.constant 0 : index
    %87 = memref.load %arg2[%c0_29, %c0_30] : memref<1x1xf32, #tpu.memory_space<smem>>
    memref.store %86, %arg2[%c0_29, %c0_30] : memref<1x1xf32, #tpu.memory_space<smem>>
    return
  }
}

</mosaic_0001>

<llo_original>
// kernel: forward.1
$region0: #{forward.1}
  #allocation0 [shape = 'u32[]', space=smem, size = 0x4, offset = 0x4, fixed_abs, tag = 'smem constant byte address 0x4 - core index']
  #allocation1 [shape = 'u32[144,128]{1,0:T(1,128)}', space=vmem, size = 0x12000, scoped, tag = 'internal scratch']
  %s0 = inlined_call_operand.vmem [shape: s32[16,1], index: 0, kind: input, shape index: {}]
  %s1 = inlined_call_operand.vmem [shape: f32[120,64], index: 1, kind: input, shape index: {}]
  %s2 = inlined_call_operand.hbm [shape: f32[1,1], index: 2, kind: output, shape index: {}]
  %s3 = sld [smem:[#allocation0]]
  $region18: #{forward.1} parent=0
    _
  %s5 = ssub.s32 1, %s3
  %s6 = scalar_select 0, %s5, %s3
  $region1: #{forward.1} parent=0
    #allocation2 [shape = 'u8[512]{0}', space=smem, size = 0x200, scoped, tag = 'output window, operand 0, single buffered']
    #allocation3 [shape = 's32[1]{0}', space=sflag, size = 0x4, scoped, tag = 'scoped memory for forward.1']
    %7 = vsyncpa [#allocation3], 0
    // Predicated region
    $region2: #{forward.1} parent=1 // pred_check
      _
    $region3: #{forward.1} parent=1 // pred_check_branch
      %9 = sbr.rel (0) target = $region5
    $region4: #{forward.1} parent=1 // pred_region
      _
    $region5: #{forward.1} parent=1 // pred_fallthru
      _
    // Predicated region
    $region6: #{forward.1} parent=1 // pred_check
      _
    $region7: #{forward.1} parent=1 // pred_check_branch
      %11 = sbr.rel (0) target = $region9
    $region8: #{forward.1} parent=1 // pred_region
      _
    $region9: #{forward.1} parent=1 // pred_fallthru
      _
    %v12 = vld [vmem:[%s0] sm:$0xff]
    %v13 = vld [vmem:[%s0 + $0x8] sm:$0xff]
    %v14 = vlaneseq
    %v15 = vand.u32 %v14, 127
    %16 = vset.pattern.permute.xlu0 0
    %17 = vperm.xlu0 %16, %v12
    %v18 = vpop.permute.xlu0 %17
    %19 = vset.pattern.permute.xlu0 0
    %20 = vperm.xlu0 %19, %v13
    %v21 = vpop.permute.xlu0 %20
    %vm22 = vcmp.eq.s32.totalorder %v15, %v18
    %vm23 = vcmp.eq.s32.totalorder %v15, %v21
    %v24 = vsel %vm22, 1, 0
    %v25 = vsel %vm23, 1, 0
    %v26 = vcvt.s32.f32 %v24
    %v27 = vcvt.s32.f32 %v25
    %v28 = vld [vmem:[%s1 + $0x60] sm:$0xff]
    %v29 = vld [vmem:[%s1 + $0x68] sm:$0xff]
    %v30 = vld [vmem:[%s1 + $0x70] sm:$0xf]
    %vm31 = vcmask 162816
    %v33 = vsel %vm31, %v26, 0
    %v36 = vsel %vm31, %v27, 0
    %vm38 = vcmask 1043456
    %v40 = vsel %vm38, %v30, 0
    %42 = vmatprep.subr.mxu0 0.0
    %43 = vmatpush1.msra.mxu0 %v28
    %44 = vmatprep.subr.mxu0 0.0
    %45 = vmatpush1.msra.mxu0 %v29
    %46 = vmatprep.subr.mxu0 0.0
    %47 = vmatpush1.msra.mxu0 %v40
    %48 = vmatprep.subr.mxu0 0.0
    %49 = vmatpush1.msra.mxu0 0.0
    %50 = vmatprep.subr.mxu0 0.0
    %51 = vmatpush1.msra.mxu0 0.0
    %52 = vmatprep.subr.mxu0 0.0
    %53 = vmatpush1.msra.mxu0 0.0
    %54 = vmatprep.subr.mxu0 0.0
    %55 = vmatpush1.msra.mxu0 0.0
    %56 = vmatprep.subr.mxu0 0.0
    %57 = vmatpush1.msra.mxu0 0.0
    %58 = vmatprep.subr.mxu0 0.0
    %59 = vmatpush1.msra.mxu0 0.0
    %60 = vmatprep.subr.mxu0 0.0
    %61 = vmatpush1.msra.mxu0 0.0
    %62 = vmatprep.subr.mxu0 0.0
    %63 = vmatpush1.msra.mxu0 0.0
    %64 = vmatprep.subr.mxu0 0.0
    %65 = vmatpush1.msra.mxu0 0.0
    %66 = vmatprep.subr.mxu0 0.0
    %67 = vmatpush1.msra.mxu0 0.0
    %68 = vmatprep.subr.mxu0 0.0
    %69 = vmatpush1.msra.mxu0 0.0
    %70 = vmatprep.subr.mxu0 0.0
    %71 = vmatpush1.msra.mxu0 0.0
    %72 = vmatprep.subr.mxu0 0.0
    %73 = vmatpush1.msra.mxu0 0.0
    %74 = vmatprep.subr.mxu0 0.0
    %75 = vmatpush1.msra.mxu0 0.0
    %76 = vmatprep.subr.mxu0 0.0
    %77 = vmatpush1.msra.mxu0 0.0
    %78 = vmatprep.subr.mxu0 0.0
    %79 = vmatpush1.msra.mxu0 0.0
    %80 = vmatprep.subr.mxu0 0.0
    %81 = vmatpush1.msra.mxu0 0.0
    %82 = vmatprep.subr.mxu0 0.0
    %83 = vmatpush1.msra.mxu0 0.0
    %84 = vmatprep.subr.mxu0 0.0
    %85 = vmatpush1.msra.mxu0 0.0
    %86 = vmatprep.subr.mxu0 0.0
    %87 = vmatpush1.msra.mxu0 0.0
    %88 = vmatprep.subr.mxu0 0.0
    %89 = vmatpush1.msra.mxu0 0.0
    %90 = vmatprep.subr.mxu0 0.0
    %91 = vmatpush1.msra.mxu0 0.0
    %92 = vmatprep.subr.mxu0 0.0
    %93 = vmatpush1.msra.mxu0 0.0
    %94 = vmatprep.subr.mxu0 0.0
    %95 = vmatpush1.msra.mxu0 0.0
    %96 = vmatprep.subr.mxu0 0.0
    %97 = vmatpush1.msra.mxu0 0.0
    %98 = vmatprep.subr.mxu0 0.0
    %99 = vmatpush1.msra.mxu0 0.0
    %100 = vmatprep.subr.mxu0 0.0
    %101 = vmatpush1.msra.mxu0 0.0
    %102 = vmatprep.subr.mxu0 0.0
    %103 = vmatpush1.msra.mxu0 0.0
    %104 = vmatprep.subr.mxu0 0.0
    %105 = vmatpush1.msra.mxu0 0.0
    %106 = vmatprep.mubr.f32.mxu0 0.0
    %107 = vmatmul.mubr.f32.gmra.mrb[0].mxu0 %v33
    %v108 = vpop.f32.mrb[0].mxu0
    %v109 = vadd.f32 0.0, %v108
    %v110 = vpop.f32.mrb[0].mxu0
    %111 = vmatprep.mubr.f32.mxu0 0.0
    %112 = vmatmul.mubr.f32.gmra.mrb[0].mxu0 %v36
    %v113 = vpop.f32.mrb[0].mxu0
    %v114 = vadd.f32 0.0, %v113
    %v115 = vpop.f32.mrb[0].mxu0
    %116 = vdwg.mxu0
    %v117 = vld [vmem:[%s1] sm:$0xff]
    %v118 = vld [vmem:[%s1 + $0x8] sm:$0xff]
    %v119 = vld [vmem:[%s1 + $0x10] sm:$0x1]
    %v120 = vld [vmem:[%s1 + $0x18] sm:$0xff]
    %v121 = vld [vmem:[%s1 + $0x20] sm:$0xff]
    %v122 = vld [vmem:[%s1 + $0x28] sm:$0xff]
    %v123 = vld [vmem:[%s1 + $0x30] sm:$0xff]
    %v124 = vld [vmem:[%s1 + $0x38] sm:$0xff]
    %v125 = vld [vmem:[%s1 + $0x40] sm:$0xff]
    %v126 = vld [vmem:[%s1 + $0x48] sm:$0xff]
    %v127 = vld [vmem:[%s1 + $0x50] sm:$0xff]
    %v128 = vld [vmem:[%s1 + $0x58] sm:$0x1]
    %v129 = vld [vmem:[%s1 + $0x59] sm:$0x1]
    %v130 = vld [vmem:[%s1 + $0x5a] sm:$0x1]
    %v131 = vld [vmem:[%s1 + $0x5b] sm:$0x1]
    %v132 = vld [vmem:[%s1 + $0x5c] sm:$0x1]
    %v133 = vld [vmem:[%s1 + $0x5d] sm:$0x1]
    %v134 = vlaneseq
    %v135 = vshrl.u32 %v134, 7
    %v136 = vsub.s32 0, %v135
    %v137 = vrot.slane %v119, %v136
    %vm138 = vcmask 130048
    %v140 = vsel %vm138, %v109, 0
    %v143 = vsel %vm138, %v114, 0
    %145 = vmatprep.subr.mxu0 0.0
    %146 = vmatpush1.msra.mxu0 %v117
    %147 = vmatprep.subr.mxu0 0.0
    %148 = vmatpush1.msra.mxu0 %v118
    %149 = vmatprep.subr.mxu0 0.0
    %150 = vmatpush1.msra.mxu0 0.0
    %151 = vmatprep.subr.mxu0 0.0
    %152 = vmatpush1.msra.mxu0 0.0
    %153 = vmatprep.subr.mxu0 0.0
    %154 = vmatpush1.msra.mxu0 0.0
    %155 = vmatprep.subr.mxu0 0.0
    %156 = vmatpush1.msra.mxu0 0.0
    %157 = vmatprep.subr.mxu0 0.0
    %158 = vmatpush1.msra.mxu0 0.0
    %159 = vmatprep.subr.mxu0 0.0
    %160 = vmatpush1.msra.mxu0 0.0
    %161 = vmatprep.subr.mxu0 0.0
    %162 = vmatpush1.msra.mxu0 0.0
    %163 = vmatprep.subr.mxu0 0.0
    %164 = vmatpush1.msra.mxu0 0.0
    %165 = vmatprep.subr.mxu0 0.0
    %166 = vmatpush1.msra.mxu0 0.0
    %167 = vmatprep.subr.mxu0 0.0
    %168 = vmatpush1.msra.mxu0 0.0
    %169 = vmatprep.subr.mxu0 0.0
    %170 = vmatpush1.msra.mxu0 0.0
    %171 = vmatprep.subr.mxu0 0.0
    %172 = vmatpush1.msra.mxu0 0.0
    %173 = vmatprep.subr.mxu0 0.0
    %174 = vmatpush1.msra.mxu0 0.0
    %175 = vmatprep.subr.mxu0 0.0
    %176 = vmatpush1.msra.mxu0 0.0
    %177 = vmatprep.subr.mxu0 0.0
    %178 = vmatpush1.msra.mxu0 0.0
    %179 = vmatprep.subr.mxu0 0.0
    %180 = vmatpush1.msra.mxu0 0.0
    %181 = vmatprep.subr.mxu0 0.0
    %182 = vmatpush1.msra.mxu0 0.0
    %183 = vmatprep.subr.mxu0 0.0
    %184 = vmatpush1.msra.mxu0 0.0
    %185 = vmatprep.subr.mxu0 0.0
    %186 = vmatpush1.msra.mxu0 0.0
    %187 = vmatprep.subr.mxu0 0.0
    %188 = vmatpush1.msra.mxu0 0.0
    %189 = vmatprep.subr.mxu0 0.0
    %190 = vmatpush1.msra.mxu0 0.0
    %191 = vmatprep.subr.mxu0 0.0
    %192 = vmatpush1.msra.mxu0 0.0
    %193 = vmatprep.subr.mxu0 0.0
    %194 = vmatpush1.msra.mxu0 0.0
    %195 = vmatprep.subr.mxu0 0.0
    %196 = vmatpush1.msra.mxu0 0.0
    %197 = vmatprep.subr.mxu0 0.0
    %198 = vmatpush1.msra.mxu0 0.0
    %199 = vmatprep.subr.mxu0 0.0
    %200 = vmatpush1.msra.mxu0 0.0
    %201 = vmatprep.subr.mxu0 0.0
    %202 = vmatpush1.msra.mxu0 0.0
    %203 = vmatprep.subr.mxu0 0.0
    %204 = vmatpush1.msra.mxu0 0.0
    %205 = vmatprep.subr.mxu0 0.0
    %206 = vmatpush1.msra.mxu0 0.0
    %207 = vmatprep.subr.mxu0 0.0
    %208 = vmatpush1.msra.mxu0 0.0
    %209 = vmatprep.mubr.f32.mxu0 0.0
    %210 = vmatmul.mubr.f32.gmra.mrb[0].mxu0 %v140
    %v211 = vpop.f32.mrb[0].mxu0
    %v212 = vadd.f32 %v137, %v211
    %v213 = vpop.f32.mrb[0].mxu0
    %214 = vmatprep.mubr.f32.mxu0 0.0
    %215 = vmatmul.mubr.f32.gmra.mrb[0].mxu0 %v143
    %v216 = vpop.f32.mrb[0].mxu0
    %v217 = vadd.f32 %v137, %v216
    %v218 = vpop.f32.mrb[0].mxu0
    %219 = vdwg.mxu0
    %v220 = vmul.f32 %v212, %v212
    %v221 = vmul.f32 %v217, %v217
    %v222 = vmul.f32 %v212, %v220
    %v223 = vmul.f32 %v217, %v221
    %v224 = vmul.f32 %v222, 0.044715
    %v225 = vmul.f32 %v223, 0.044715
    %v226 = vadd.f32 %v212, %v224
    %v227 = vadd.f32 %v217, %v225
    %v228 = vmul.f32 %v226, 0.7978846
    %v229 = vmul.f32 %v227, 0.7978846
    %v230 = vtanh.pop %v228
    %v231 = vtanh.pop %v229
    %v232 = vadd.f32 %v230, 1.0
    %v233 = vadd.f32 %v231, 1.0
    %v234 = vmul.f32 %v232, 0.5
    %v235 = vmul.f32 %v233, 0.5
    %v236 = vmul.f32 %v212, %v234
    %v237 = vmul.f32 %v217, %v235
    %v238 = vlaneseq
    %v239 = vshrl.u32 %v238, 7
    %v240 = vsub.s32 0, %v239
    %v241 = vrot.slane %v128, %v240
    %vm242 = vcmask 523264
    %v244 = vsel %vm242, %v236, 0
    %v247 = vsel %vm242, %v237, 0
    %249 = vmatprep.subr.mxu0 0.0
    %250 = vmatpush1.msra.mxu0 %v120
    %251 = vmatprep.subr.mxu0 0.0
    %252 = vmatpush1.msra.mxu0 %v121
    %253 = vmatprep.subr.mxu0 0.0
    %254 = vmatpush1.msra.mxu0 %v122
    %255 = vmatprep.subr.mxu0 0.0
    %256 = vmatpush1.msra.mxu0 %v123
    %257 = vmatprep.subr.mxu0 0.0
    %258 = vmatpush1.msra.mxu0 %v124
    %259 = vmatprep.subr.mxu0 0.0
    %260 = vmatpush1.msra.mxu0 %v125
    %261 = vmatprep.subr.mxu0 0.0
    %262 = vmatpush1.msra.mxu0 %v126
    %263 = vmatprep.subr.mxu0 0.0
    %264 = vmatpush1.msra.mxu0 %v127
    %265 = vmatprep.subr.mxu0 0.0
    %266 = vmatpush1.msra.mxu0 0.0
    %267 = vmatprep.subr.mxu0 0.0
    %268 = vmatpush1.msra.mxu0 0.0
    %269 = vmatprep.subr.mxu0 0.0
    %270 = vmatpush1.msra.mxu0 0.0
    %271 = vmatprep.subr.mxu0 0.0
    %272 = vmatpush1.msra.mxu0 0.0
    %273 = vmatprep.subr.mxu0 0.0
    %274 = vmatpush1.msra.mxu0 0.0
    %275 = vmatprep.subr.mxu0 0.0
    %276 = vmatpush1.msra.mxu0 0.0
    %277 = vmatprep.subr.mxu0 0.0
    %278 = vmatpush1.msra.mxu0 0.0
    %279 = vmatprep.subr.mxu0 0.0
    %280 = vmatpush1.msra.mxu0 0.0
    %281 = vmatprep.subr.mxu0 0.0
    %282 = vmatpush1.msra.mxu0 0.0
    %283 = vmatprep.subr.mxu0 0.0
    %284 = vmatpush1.msra.mxu0 0.0
    %285 = vmatprep.subr.mxu0 0.0
    %286 = vmatpush1.msra.mxu0 0.0
    %287 = vmatprep.subr.mxu0 0.0
    %288 = vmatpush1.msra.mxu0 0.0
    %289 = vmatprep.subr.mxu0 0.0
    %290 = vmatpush1.msra.mxu0 0.0
    %291 = vmatprep.subr.mxu0 0.0
    %292 = vmatpush1.msra.mxu0 0.0
    %293 = vmatprep.subr.mxu0 0.0
    %294 = vmatpush1.msra.mxu0 0.0
    %295 = vmatprep.subr.mxu0 0.0
    %296 = vmatpush1.msra.mxu0 0.0
    %297 = vmatprep.subr.mxu0 0.0
    %298 = vmatpush1.msra.mxu0 0.0
    %299 = vmatprep.subr.mxu0 0.0
    %300 = vmatpush1.msra.mxu0 0.0
    %301 = vmatprep.subr.mxu0 0.0
    %302 = vmatpush1.msra.mxu0 0.0
    %303 = vmatprep.subr.mxu0 0.0
    %304 = vmatpush1.msra.mxu0 0.0
    %305 = vmatprep.subr.mxu0 0.0
    %306 = vmatpush1.msra.mxu0 0.0
    %307 = vmatprep.subr.mxu0 0.0
    %308 = vmatpush1.msra.mxu0 0.0
    %309 = vmatprep.subr.mxu0 0.0
    %310 = vmatpush1.msra.mxu0 0.0
    %311 = vmatprep.subr.mxu0 0.0
    %312 = vmatpush1.msra.mxu0 0.0
    %313 = vmatprep.mubr.f32.mxu0 0.0
    %314 = vmatmul.mubr.f32.gmra.mrb[0].mxu0 %v244
    %v315 = vpop.f32.mrb[0].mxu0
    %v316 = vadd.f32 %v241, %v315
    %v317 = vpop.f32.mrb[0].mxu0
    %318 = vmatprep.mubr.f32.mxu0 0.0
    %319 = vmatmul.mubr.f32.gmra.mrb[0].mxu0 %v247
    %v320 = vpop.f32.mrb[0].mxu0
    %v321 = vadd.f32 %v241, %v320
    %v322 = vpop.f32.mrb[0].mxu0
    %323 = vdwg.mxu0
    %v324 = vsel %vm138, %v316, 0.0
    %325 = vadd.xlane.f32.xlu0 %v324
    %v326 = vpop.xlane.xlu0 %325
    %v327 = vsel %vm138, %v321, 0.0
    %328 = vadd.xlane.f32.xlu0 %v327
    %v329 = vpop.xlane.xlu0 %328
    %v330 = vrcp.pop 16.0
    %v331 = vmul.f32 %v326, %v330
    %v332 = vmul.f32 %v329, %v330
    %v333 = vsub.f32 %v316, %v331
    %v334 = vsub.f32 %v321, %v332
    %v335 = vmul.f32 %v333, %v333
    %v336 = vmul.f32 %v334, %v334
    %v337 = vsel %vm138, %v335, 0.0
    %338 = vadd.xlane.f32.xlu0 %v337
    %v339 = vpop.xlane.xlu0 %338
    %v340 = vsel %vm138, %v336, 0.0
    %341 = vadd.xlane.f32.xlu0 %v340
    %v342 = vpop.xlane.xlu0 %341
    %v343 = vmul.f32 %v339, %v330
    %v344 = vmul.f32 %v342, %v330
    %v345 = vadd.f32 %v343, 1e-05
    %v346 = vadd.f32 %v344, 1e-05
    %v347 = vrsqrt.pop %v345
    %v348 = vrsqrt.pop %v346
    %v349 = vmul.f32 %v333, %v347
    %v350 = vmul.f32 %v334, %v348
    %v351 = vlaneseq
    %v352 = vshrl.u32 %v351, 7
    %v353 = vsub.s32 0, %v352
    %v354 = vrot.slane %v129, %v353
    %v355 = vmul.f32 %v349, %v354
    %v356 = vmul.f32 %v350, %v354
    %v357 = vlaneseq
    %v358 = vshrl.u32 %v357, 7
    %v359 = vsub.s32 0, %v358
    %v360 = vrot.slane %v130, %v359
    %v361 = vadd.f32 %v355, %v360
    %v362 = vadd.f32 %v356, %v360
    %v363 = vadd.f32 %v109, %v361
    %v364 = vadd.f32 %v114, %v362
    %v365 = vsel %vm138, %v363, 0.0
    %366 = vadd.xlane.f32.xlu0 %v365
    %v367 = vpop.xlane.xlu0 %366
    %v368 = vsel %vm138, %v364, 0.0
    %369 = vadd.xlane.f32.xlu0 %v368
    %v370 = vpop.xlane.xlu0 %369
    %v371 = vmul.f32 %v367, %v330
    %v372 = vmul.f32 %v370, %v330
    %v373 = vsub.f32 %v363, %v371
    %v374 = vsub.f32 %v364, %v372
    %v375 = vmul.f32 %v373, %v373
    %v376 = vmul.f32 %v374, %v374
    %v377 = vsel %vm138, %v375, 0.0
    %378 = vadd.xlane.f32.xlu0 %v377
    %v379 = vpop.xlane.xlu0 %378
    %v380 = vsel %vm138, %v376, 0.0
    %381 = vadd.xlane.f32.xlu0 %v380
    %v382 = vpop.xlane.xlu0 %381
    %v383 = vmul.f32 %v379, %v330
    %v384 = vmul.f32 %v382, %v330
    %v385 = vadd.f32 %v383, 1e-05
    %v386 = vadd.f32 %v384, 1e-05
    %v387 = vrsqrt.pop %v385
    %v388 = vrsqrt.pop %v386
    %v389 = vmul.f32 %v373, %v387
    %v390 = vmul.f32 %v374, %v388
    %v391 = vlaneseq
    %v392 = vshrl.u32 %v391, 7
    %v393 = vsub.s32 0, %v392
    %v394 = vrot.slane %v131, %v393
    %v395 = vmul.f32 %v389, %v394
    %v396 = vmul.f32 %v390, %v394
    %v397 = vlaneseq
    %v398 = vshrl.u32 %v397, 7
    %v399 = vsub.s32 0, %v398
    %v400 = vrot.slane %v132, %v399
    %v401 = vadd.f32 %v395, %v400
    %v402 = vadd.f32 %v396, %v400
    %v403 = vlaneseq
    %v404 = vshrl.u32 %v403, 7
    %v405 = vsub.s32 0, %v404
    %v406 = vrot.slane %v133, %v405
    %v407 = vmul.f32 %v401, %v406
    %v408 = vmul.f32 %v402, %v406
    %v409 = vsel %vm138, %v407, 0.0
    %v410 = vsel %vm138, %v408, 0.0
    %v411 = vadd.f32 %v409, %v410
    %412 = vadd.xlane.f32.xlu0 %v411
    %v413 = vpop.xlane.xlu0 %412
    %v414 = vrot.slane %v413, 4
    %v415 = vadd.f32 %v413, %v414
    %v416 = vrot.slane %v415, 2
    %v417 = vadd.f32 %v415, %v416
    %v418 = vrot.slane %v417, 1
    %v419 = vadd.f32 %v417, %v418
    %s420 = vtos %v419
    %s421 = scalar_lea.smem [#allocation2], 0
    %422 = sst [smem:[%s421]] %s420
    // Predicated region
    $region10: #{forward.1} parent=1 // pred_check
      _
    $region11: #{forward.1} parent=1 // pred_check_branch
      %424 = sbr.rel (0) target = $region13
    $region12: #{forward.1} parent=1 // pred_region
      %s426 = ssub.s32 16, 16
      %427 = vsyncadd [#allocation3], %s426
      %430 = dma.smem_to_hbm [#allocation2], 16, %s2, [#allocation3]
    $region13: #{forward.1} parent=1 // pred_fallthru
      _
    // Predicated region
    $region14: #{forward.1} parent=1 // pred_check
      _
    $region15: #{forward.1} parent=1 // pred_check_branch
      %432 = sbr.rel (0) target = $region17
    $region16: #{forward.1} parent=1 // pred_region
      %433 = dma.done [#allocation3], 16
    $region17: #{forward.1} parent=1 // pred_fallthru
      _
    %434 = sfence
    %435 = vsyncpa [#allocation3], 1

</llo_original>
